<compile_context>
chip_gen: v7x
topology: tpu7x:2x2x1
jax: 0.10.0
libtpu: 0.0.40
codegen_flags: <defaults>
</compile_context>

<pallas_src>
import math

import jax
import jax.numpy as jnp
from jax.experimental import pallas as pl
from jax.experimental.pallas import tpu as pltpu


def _snake_kernel(a_ref, inv_a_ref, x_ref, o_ref):
    # a_ref / inv_a_ref: (1, tC) f32 row vectors (broadcast along sublanes);
    # x_ref / o_ref: (tM, tC) block of the flattened input.
    x = x_ref[...].astype(jnp.float32)   # compute in f32 (parameter precision)
    s = jnp.sin(x * a_ref[...])
    o_ref[...] = (x + (s * s) * inv_a_ref[...]).astype(o_ref.dtype)


def _round_up(v: int, m: int) -> int:
    return ((v + m - 1) // m) * m


def snake(x: jax.Array, a: jax.Array, *, target_block_bytes: int = 8 << 20) -> jax.Array:
    """Snake activation: x + (1/a) * sin(a*x)**2, `a` broadcast over x's trailing dims."""
    orig_shape = x.shape
    a_shape = tuple(a.shape)
    C = int(math.prod(a_shape)) if a_shape else 1
    assert tuple(orig_shape[len(orig_shape) - len(a_shape):]) == a_shape, \
        "trailing dims of x must match a's shape"
    total = int(math.prod(orig_shape))
    M = total // C

    a_flat = a.reshape(C).astype(jnp.float32)

    itemsize = jnp.dtype(x.dtype).itemsize
    sublane = 8 * max(1, 4 // itemsize)          # f32: 8, bf16: 16, int8/fp8: 32

    # --- Make the lane axis 128-aligned (lane-dense unmasked stores). ---------
    g = 1 if C % 128 == 0 else 128 // math.gcd(C, 128)
    Mp = _round_up(M, g)
    x2d = x.reshape(M, C)
    if Mp != M:
        # Pad a handful of dummy rows so the row fold always succeeds; the
        # padded rows are computed and discarded (cheaper than masked stores).
        x2d = jnp.pad(x2d, ((0, Mp - M), (0, 0)))
    Mg, Cg = Mp // g, C * g                       # Cg is always a multiple of 128
    x2 = x2d.reshape(Mg, Cg)

    a2 = (jnp.tile(a_flat, g) if g > 1 else a_flat).reshape(1, Cg)
    inv_a2 = 1.0 / a2                             # hoisted: one-time (Cg,) divide

    # --- Lane tile: keep the full contiguous row; chunk lanes only if a single
    #     minimum-height block would already blow the budget (rare, huge C). ---
    if sublane * Cg * itemsize > target_block_bytes:
        tC = max(128, (target_block_bytes // (sublane * itemsize)) // 128 * 128)
        tC = min(tC, Cg)
    else:
        tC = Cg

    # --- Row tile: dtype-aware sublane multiple, ~target_block_bytes blocks. --
    rows = max(sublane, (target_block_bytes // max(1, tC * itemsize)) // sublane * sublane)
    if rows >= Mg:
        if Mg >= 2 * sublane:
            # Keep >=2 parallel row tiles so both v7x TensorCores split the stream.
            tM = _round_up((Mg + 1) // 2, sublane)
        else:
            tM = Mg                               # full-dim block (allowed)
    else:
        tM = rows

    grid = (pl.cdiv(Mg, tM), pl.cdiv(Cg, tC))

    # --- VMEM limit: real footprint is ~2x x-block + 2x out-block + tiny a rows;
    #     cap generation-aware (leave headroom under v7x's 64 MiB per-TC VMEM). --
    block_bytes = tM * tC * itemsize
    needed = 4 * block_bytes + 4 * tC * 4 + (2 << 20)
    try:
        phys = int(pltpu.get_tpu_info().vmem_capacity_bytes)
    except Exception:
        phys = 64 << 20                           # conservative (v7x) fallback
    cap = max(32 << 20, phys - (16 << 20))
    vmem_limit = int(min(max(needed, 4 << 20), cap))

    out2 = pl.pallas_call(
        _snake_kernel,
        out_shape=jax.ShapeDtypeStruct((Mg, Cg), x.dtype),
        grid_spec=pltpu.PrefetchScalarGridSpec(
            num_scalar_prefetch=0,
            grid=grid,
            in_specs=[
                # a / 1/a row vectors: same block for every row tile, follow lane tile j.
                pl.BlockSpec((1, tC), lambda i, j: (0, j)),
                pl.BlockSpec((1, tC), lambda i, j: (0, j)),
                # x block: one (tM, tC) tile per grid step.
                pl.BlockSpec((tM, tC), lambda i, j: (i, j)),
            ],
            out_specs=pl.BlockSpec((tM, tC), lambda i, j: (i, j)),
        ),
        compiler_params=pltpu.CompilerParams(
            dimension_semantics=("parallel", "parallel"),
            vmem_limit_bytes=vmem_limit,
        ),
    )(a2, inv_a2, x2)

    out = out2.reshape(Mp, C)
    if Mp != M:
        out = out[:M]
    return out.reshape(orig_shape)


if __name__ == "__main__":
    key = jax.random.PRNGKey(0)
    k_x, k_a, k_x2 = jax.random.split(key, 3)

    # x: (batch=2, seq=8, in_features=32); `a` matches the last (feature) dim.
    B, T, C = 2, 8, 32
    x = jax.random.normal(k_x, (B, T, C), dtype=jnp.float32)
    # TODO(synk): the PyTorch module draws `a` from Exponential(0.1) in __init__ when
    # not supplied; that is an init detail, not part of forward, so we use a
    # deterministic positive draw here.
    a = jax.random.uniform(k_a, (C,), minval=0.5, maxval=2.0, dtype=jnp.float32)

    out = jax.block_until_ready(snake(x, a))
    ref = x + (1.0 / a) * jnp.sin(x * a) ** 2
    assert out.shape == x.shape
    assert jnp.allclose(out, ref, atol=1e-5, rtol=1e-5), float(jnp.max(jnp.abs(out - ref)))

    # Second case exercising the row-fold + padding path (C % 128 != 0, M % g != 0).
    C2 = 24
    x_b = jax.random.normal(k_x2, (3, 5, C2), dtype=jnp.float32)
    a_b = jax.random.uniform(k_a, (C2,), minval=0.5, maxval=2.0, dtype=jnp.float32)
    out_b = jax.block_until_ready(snake(x_b, a_b))
    ref_b = x_b + (1.0 / a_b) * jnp.sin(x_b * a_b) ** 2
    assert out_b.shape == x_b.shape
    assert jnp.allclose(out_b, ref_b, atol=1e-5, rtol=1e-5), float(jnp.max(jnp.abs(out_b - ref_b)))

    print("KERNEL_OK")
</pallas_src>

<mosaic_0001>
module attributes {stable_mosaic.version = 11 : i64} {
  func.func @_snake_kernel(%arg0: i32, %arg1: i32, %arg2: memref<1x128xf32, #tpu.memory_space<vmem>>, %arg3: memref<1x128xf32, #tpu.memory_space<vmem>>, %arg4: memref<4x128xf32, #tpu.memory_space<vmem>>, %arg5: memref<4x128xf32, #tpu.memory_space<vmem>>) attributes {dimension_semantics = [#tpu.dimension_semantics<parallel>, #tpu.dimension_semantics<parallel>], iteration_bounds = array<i64: 1, 1>, scalar_prefetch = 0 : i64, scratch_operands = 0 : i64, tpu.core_type = #tpu.core_type<tc>, window_params = [{transform_indices = @transform_0, window_bounds = array<i64: 1, 128>}, {transform_indices = @transform_1, window_bounds = array<i64: 1, 128>}, {transform_indices = @transform_2, window_bounds = array<i64: 4, 128>}, {transform_indices = @transform_3, window_bounds = array<i64: 4, 128>}]} {
    %c0 = arith.constant 0 : index
    %c0_0 = arith.constant 0 : index
    %0 = vector.load %arg4[%c0, %c0_0] : memref<4x128xf32, #tpu.memory_space<vmem>>, vector<4x128xf32>
    %c0_1 = arith.constant 0 : index
    %c0_2 = arith.constant 0 : index
    %1 = vector.load %arg2[%c0_1, %c0_2] : memref<1x128xf32, #tpu.memory_space<vmem>>, vector<1x128xf32>
    %2 = vector.broadcast %1 : vector<1x128xf32> to vector<4x128xf32>
    %3 = arith.mulf %0, %2 : vector<4x128xf32>
    %4 = math.sin %3 : vector<4x128xf32>
    %5 = arith.mulf %4, %4 : vector<4x128xf32>
    %c0_3 = arith.constant 0 : index
    %c0_4 = arith.constant 0 : index
    %6 = vector.load %arg3[%c0_3, %c0_4] : memref<1x128xf32, #tpu.memory_space<vmem>>, vector<1x128xf32>
    %7 = vector.broadcast %6 : vector<1x128xf32> to vector<4x128xf32>
    %8 = arith.mulf %5, %7 : vector<4x128xf32>
    %9 = arith.addf %0, %8 : vector<4x128xf32>
    %c0_5 = arith.constant 0 : index
    %c0_6 = arith.constant 0 : index
    %10 = vector.load %arg5[%c0_5, %c0_6] : memref<4x128xf32, #tpu.memory_space<vmem>>, vector<4x128xf32>
    tpu.vector_store %arg5[%c0_5, %c0_6], %9 {strides = array<i32>} : memref<4x128xf32, #tpu.memory_space<vmem>>, vector<4x128xf32>,
    return
  }
  func.func @transform_0(%arg0: i32, %arg1: i32) -> (i32, i32) {
    %c0_i32 = arith.constant 0 : i32
    %c0_i32_0 = arith.constant 0 : i32
    return %c0_i32, %arg1 : i32, i32
  }
  func.func @transform_1(%arg0: i32, %arg1: i32) -> (i32, i32) {
    %c0_i32 = arith.constant 0 : i32
    %c0_i32_0 = arith.constant 0 : i32
    return %c0_i32, %arg1 : i32, i32
  }
  func.func @transform_2(%arg0: i32, %arg1: i32) -> (i32, i32) {
    %c0_i32 = arith.constant 0 : i32
    return %arg0, %arg1 : i32, i32
  }
  func.func @transform_3(%arg0: i32, %arg1: i32) -> (i32, i32) {
    %c0_i32 = arith.constant 0 : i32
    return %arg0, %arg1 : i32, i32
  }
}

</mosaic_0001>

<llo_original>
// kernel: tpu_custom_call.1
$region0: #{tpu_custom_call.1}
  #allocation0 [shape = 'u32[]', space=smem, size = 0x4, offset = 0x4, fixed_abs, tag = 'smem constant byte address 0x4 - core index']
  #allocation1 [shape = 'u32[144,128]{1,0:T(1,128)}', space=vmem, size = 0x12000, scoped, tag = 'internal scratch']
  %s0 = inlined_call_operand.hbm [shape: f32[1,128], index: 0, kind: input, shape index: {}]
  %s1 = inlined_call_operand.vmem [shape: f32[1,128], index: 1, kind: input, shape index: {}]
  %s2 = inlined_call_operand.vmem [shape: f32[4,128], index: 2, kind: input, shape index: {}]
  %s3 = inlined_call_operand.hbm [shape: f32[4,128], index: 3, kind: output, shape index: {}]
  %s4 = sld [smem:[#allocation0]]
  $region26: #{tpu_custom_call.1} parent=0
    _
  %s6 = ssub.s32 1, %s4
  %s7 = scalar_select 0, %s6, %s4
  $region1: #{tpu_custom_call.1} parent=0
    #allocation2 [shape = 'u8[512]{0}', space=vmem, size = 0x400, scoped, tag = 'input window, operand 0, single buffered']
    #allocation3 [shape = 's32[1]{0}', space=sflag, size = 0x4, scoped, tag = 'scoped memory for tpu_custom_call.1']
    #allocation4 [shape = 's32[1]{0}', space=sflag, size = 0x4, scoped, tag = 'scoped memory for tpu_custom_call.1']
    #allocation5 [shape = 'u8[2048]{0}', space=vmem, size = 0x800, scoped, tag = 'output window, operand 0, single buffered']
    %8 = vsyncpa [#allocation3], 0
    %9 = vsyncpa [#allocation4], 0
    // Predicated region
    $region2: #{tpu_custom_call.1} parent=1 // pred_check
      _
    $region3: #{tpu_custom_call.1} parent=1 // pred_check_branch
      %11 = sbr.rel (0) target = $region5
    $region4: #{tpu_custom_call.1} parent=1 // pred_region
      %s13 = ssub.s32 16, 16
      %14 = vsyncadd [#allocation3], %s13
      %s16 = sshll.u32 [#allocation2], 4
      %s17 = int_to_ptr.vmem [resolvable:$true] %s16
      %19 = dma.hbm_to_vmem [thread:$0]  %s0, 16, %s17, [#allocation3]
    $region5: #{tpu_custom_call.1} parent=1 // pred_fallthru
      _
    // Predicated region
    $region6: #{tpu_custom_call.1} parent=1 // pred_check
      _
    $region7: #{tpu_custom_call.1} parent=1 // pred_check_branch
      %21 = sbr.rel (0) target = $region9
    $region8: #{tpu_custom_call.1} parent=1 // pred_region
      _
    $region9: #{tpu_custom_call.1} parent=1 // pred_fallthru
      _
    // Predicated region
    $region10: #{tpu_custom_call.1} parent=1 // pred_check
      _
    $region11: #{tpu_custom_call.1} parent=1 // pred_check_branch
      %23 = sbr.rel (0) target = $region13
    $region12: #{tpu_custom_call.1} parent=1 // pred_region
      _
    $region13: #{tpu_custom_call.1} parent=1 // pred_fallthru
      _
    // Predicated region
    $region14: #{tpu_custom_call.1} parent=1 // pred_check
      _
    $region15: #{tpu_custom_call.1} parent=1 // pred_check_branch
      %25 = sbr.rel (0) target = $region17
    $region16: #{tpu_custom_call.1} parent=1 // pred_region
      %26 = dma.done [#allocation3], 16
    $region17: #{tpu_custom_call.1} parent=1 // pred_fallthru
      _
    %v27 = vld [vmem:[%s2] sm:$0xf]
    %v28 = vld [vmem:[#allocation2] sm:$0x1]
    %v30 = vlaneseq
    %v31 = vshrl.u32 %v30, 7
    %v32 = vsub.s32 0, %v31
    %v33 = vrot.slane %v28, %v32
    %v35 = vmul.f32 %v27, %v33
    %v36 = vand.u32 2147483647, %v35
    %vm37 = vcmp.le.f32.partialorder %v36, 0.7853982
    %vm38 = vcmp.lt.s32.totalorder %v35, 0
    %v39 = vand.u32 %v35, 2139095040
    %v40 = vshrl.u32 %v39, 23
    %v41 = vsub.s32 %v40, 127
    %v42 = vand.u32 2147483647, %v35
    %v43 = vand.u32 %v42, 8388607
    %v44 = vor.u32 %v43, 8388608
    %v45 = vsub.s32 0, %v44
    %v46 = vadd.s32 %v41, 1
    %vm47 = vcmp.gt.s32.totalorder %v46, 0
    %v48 = vsel %vm47, %v46, 0
    %v49 = vshrl.u32 %v48, 5
    %v50 = vand.u32 %v48, 31
    %v51 = vsub.s32 32, %v50
    %v52 = vshrl.u32 683565275, %v51
    %v53 = vshll.u32 683565275, %v50
    %v54 = vshrl.u32 2475754826, %v51
    %v55 = vor.u32 %v53, %v54
    %v56 = vshll.u32 2475754826, %v50
    %v57 = vshrl.u32 2131351028, %v51
    %v58 = vor.u32 %v56, %v57
    %v59 = vshll.u32 2131351028, %v50
    %v60 = vshrl.u32 2102212464, %v51
    %v61 = vor.u32 %v59, %v60
    %v62 = vshll.u32 2102212464, %v50
    %v63 = vshrl.u32 920167782, %v51
    %v64 = vor.u32 %v62, %v63
    %v65 = vshll.u32 920167782, %v50
    %v66 = vshrl.u32 1326507024, %v51
    %v67 = vor.u32 %v65, %v66
    %vm68 = vcmp.lt.s32.totalorder %v49, 1
    %vm69 = vcmp.lt.s32.totalorder %v49, 2
    %vm70 = vcmp.lt.s32.totalorder %v49, 3
    %vm71 = vcmp.lt.s32.totalorder %v49, 4
    %v72 = vsel %vm68, %v52, %v55
    %v73 = vsel %vm71, %v61, 2102212464
    %v74 = vsel %vm70, %v58, %v73
    %v75 = vsel %vm69, %v72, %v74
    %v76 = vsel %vm68, %v55, %v58
    %v77 = vsel %vm71, %v64, 920167782
    %v78 = vsel %vm70, %v61, %v77
    %v79 = vsel %vm69, %v76, %v78
    %v80 = vsel %vm68, %v58, %v61
    %v81 = vsel %vm71, %v67, 1326507024
    %v82 = vsel %vm70, %v64, %v81
    %v83 = vsel %vm69, %v80, %v82
    %v84 = vshll.u32 %v44, 8
    %v85 = vmul.u32.u64.compose %v84, %v83
    %v86 = vextract.low.u32 %v85
    %v87 = vextract.high.u32 %v85
    %v88 = vmul.u32.u64.compose %v84, %v79
    %v89 = vextract.low.u32 %v88
    %v90 = vextract.high.u32 %v88
    %v91 = vmul.u32 %v84, %v75
    %v92 = vadd.s32 %v87, %v89
    %vm93 = vc.u32 %v87, %v89
    %v94 = vadd.s32 %v90, 1
    %v95 = vsel %vm93, %v94, %v90
    %v96 = vadd.s32 %v91, %v95
    %v97 = vadd.s32 %v96, 536870912
    %v98 = vshrl.u32 %v97, 30
    %v99 = vshll.u32 %v98, 30
    %v100 = vsub.s32 %v96, %v99
    %vm101 = vcmp.lt.s32.totalorder %v100, 0
    %v102 = vsub.s32 0, %v100
    %v103 = vsel %vm101, %v102, %v100
    %v104 = vclz %v103
    %v105 = vsub.s32 %v104, 2
    %vm106 = vcmp.gt.s32.totalorder 0, %v105
    %v107 = vsel %vm106, 0, %v105
    %v108 = vsub.s32 32, %v107
    %v109 = vshll.u32 %v100, %v107
    %v110 = vshrl.u32 %v92, %v108
    %v111 = vor.u32 %v109, %v110
    %v112 = vsub.s32 4294967266, %v107
    %v113 = vadd.s32 %v112, 127
    %v114 = vshll.u32 %v113, 23
    %v115 = vor.u32 4788187, %v114
    %v116 = vand.u32 2147483647, %v115
    %v118 = vcvt.s32.f32 %v111
    %v119 = vmul.f32 %v118, %v116
    %v120 = vxor.u32 %v119, 2147483648
    %v121 = vsel %vm38, %v120, %v119
    %v122 = vsub.s32 4, %v98
    %v123 = vsel %vm38, %v122, %v98
    %v124 = vsel %vm37, %v35, %v121
    %v125 = vsel %vm37, 0, %v123
    %v126 = vcosq.f32.pop %v124
    %v127 = vsinq.f32.pop %v124
    %vm128 = vweird.f32 %v35
    %v129 = vadd.s32 %v125, 3
    %v130 = vand.u32 %v129, 3
    %vm131 = vcmp.lt.s32.totalorder %v130, 2
    %vm132 = vcmp.eq.s32.totalorder %v130, 0
    %v133 = vxor.u32 %v127, 2147483648
    %v134 = vsel %vm132, %v126, %v133
    %vm135 = vcmp.eq.s32.totalorder %v130, 2
    %v136 = vxor.u32 %v126, 2147483648
    %v137 = vsel %vm135, %v136, %v127
    %v138 = vsel %vm131, %v134, %v137
    %v139 = vsel %vm128, nan, %v138
    %v140 = vmul.f32 %v139, %v139
    %v141 = vld [vmem:[%s1] sm:$0x1]
    %v143 = vlaneseq
    %v144 = vshrl.u32 %v143, 7
    %v145 = vsub.s32 0, %v144
    %v146 = vrot.slane %v141, %v145
    %v148 = vmul.f32 %v140, %v146
    %v149 = vadd.f32 %v27, %v148
    %150 = vst [vmem:[#allocation5] sm:$0xf] %v149
    // Predicated region
    $region18: #{tpu_custom_call.1} parent=1 // pred_check
      _
    $region19: #{tpu_custom_call.1} parent=1 // pred_check_branch
      %152 = sbr.rel (0) target = $region21
    $region20: #{tpu_custom_call.1} parent=1 // pred_region
      %s154 = ssub.s32 64, 64
      %155 = vsyncadd [#allocation4], %s154
      %s157 = sshll.u32 [#allocation5], 4
      %s158 = int_to_ptr.vmem [resolvable:$true] %s157
      %160 = dma.vmem_to_hbm [thread:$0]  %s158, 64, %s3, [#allocation4]
    $region21: #{tpu_custom_call.1} parent=1 // pred_fallthru
      _
    // Predicated region
    $region22: #{tpu_custom_call.1} parent=1 // pred_check
      _
    $region23: #{tpu_custom_call.1} parent=1 // pred_check_branch
      %162 = sbr.rel (0) target = $region25
    $region24: #{tpu_custom_call.1} parent=1 // pred_region
      %163 = dma.done [#allocation4], 64
    $region25: #{tpu_custom_call.1} parent=1 // pred_fallthru
      _
    %164 = vsyncpa [#allocation3], 1
    %165 = vsyncpa [#allocation4], 1

</llo_original>
